<compile_context>
chip_gen: v7x
topology: tpu7x:2x2x1
jax: 0.10.0
libtpu: 0.0.40
codegen_flags: <defaults>
</compile_context>

<pallas_src>
import functools

import numpy as np
import jax
import jax.numpy as jnp
from jax import lax
from jax.experimental import pallas as pl
from jax.experimental.pallas import tpu as pltpu


def _round_up(x: int, m: int) -> int:
    return (x + m - 1) // m * m


def _default_vmem_limit_bytes() -> int:
    """Generation-aware scoped-VMEM budget (~5/8 of physical VMEM):
    ~40 MiB on v7x (64 MiB physical), ~80 MiB on v5e/v6e (128 MiB physical)."""
    fallback = 48 * 1024 * 1024
    try:
        cap = int(getattr(pltpu.get_tpu_info(), "vmem_capacity_bytes", 0))
    except Exception:
        cap = 0
    if cap <= 0:
        return fallback
    return int(min(96 * 1024 * 1024, max(32 * 1024 * 1024, (cap * 5) // 8)))


# ---------------------------------------------------------------------------
# One-shot prep kernels (run once per call; hoisted out of the (i, j) hot loop).
# ---------------------------------------------------------------------------
def _x_prep_kernel(scale_ref, x_ref, o_ref, *, normalize_x, out_dtype):
    """Row-L2-normalize x (optionally), fold in scale_cls, cast to the MXU feed dtype."""
    x = x_ref[...].astype(jnp.float32)                       # (TB, C)
    s = scale_ref[0]
    if normalize_x:
        # rsqrt(max(sum_sq, 1e-24)) == 1 / max(||x||_2, 1e-12)   (rsqrt -> EUP slot)
        inv = s * lax.rsqrt(jnp.maximum(jnp.sum(x * x, axis=1, keepdims=True), 1e-24))
        x = x * inv
    else:
        x = x * s
    o_ref[...] = x.astype(out_dtype)


def _w_prep_kernel(w_ref, o_ref, *, normalize_w, out_dtype):
    """Row-L2-normalize the (N, C) weight (== column-normalize weight.t()), cast."""
    w = w_ref[...].astype(jnp.float32)                        # (TN, C)
    if normalize_w:
        inv = lax.rsqrt(jnp.maximum(jnp.sum(w * w, axis=1, keepdims=True), 1e-24))
        w = w * inv
    o_ref[...] = w.astype(out_dtype)


# ---------------------------------------------------------------------------
# Main kernel: (pre-normalized) x tile X (pre-normalized) w tile on the MXU.
# x / w normalization is fused in-kernel only when that tile is visited exactly
# once by the grid (nn == 1 / nb == 1), so nothing is ever recomputed.
# ---------------------------------------------------------------------------
def _cosine_main_kernel(*refs, apply_x, normalize_x, apply_w, normalize_w,
                        has_bias, mxu_dtype):
    idx = 0
    scale_ref = None
    if apply_x:
        scale_ref = refs[idx]; idx += 1
    x_ref = refs[idx]; idx += 1
    w_ref = refs[idx]; idx += 1
    b_ref = None
    if has_bias:
        b_ref = refs[idx]; idx += 1
    o_ref = refs[idx]

    if apply_x:                                               # x tile visited once
        x = x_ref[...].astype(jnp.float32)
        s = scale_ref[0]
        if normalize_x:
            inv = s * lax.rsqrt(jnp.maximum(jnp.sum(x * x, axis=1, keepdims=True), 1e-24))
            x = x * inv
        else:
            x = x * s
        x = x.astype(mxu_dtype)
    else:
        x = x_ref[...]                                        # already scaled/normalized/cast

    if apply_w:                                               # w tile visited once
        w = w_ref[...].astype(jnp.float32)
        if normalize_w:
            inv_w = lax.rsqrt(jnp.maximum(jnp.sum(w * w, axis=1, keepdims=True), 1e-24))
            w = w * inv_w
        w = w.astype(mxu_dtype)
    else:
        w = w_ref[...]                                        # already normalized/cast

    # NT contraction over C on the MXU, f32 accumulation (no per-tile transpose on TPU).
    out = lax.dot_general(x, w, dimension_numbers=(((1,), (1,)), ((), ())),
                          preferred_element_type=jnp.float32)
    if has_bias:
        out = out + b_ref[...].astype(jnp.float32)            # fused epilogue bias add
    o_ref[...] = out


# ---------------------------------------------------------------------------
# Wrapper
# ---------------------------------------------------------------------------
def cosine_classifier_forward(x_in, weight, scale_cls, bias=None,
                              normalize_x=True, normalize_w=True,
                              mxu_dtype=jnp.bfloat16,
                              block_b=512, block_n=512,
                              vmem_limit_bytes=None):
    """x_in: (B, C); weight: (num_classes, C) (PyTorch param layout); scale_cls: (1,).
    Returns scale_cls * cos_sim(x_in, weight) [+ bias] as (B, num_classes) float32."""
    assert x_in.ndim == 2 and weight.ndim == 2
    B, C = x_in.shape
    N, Cw = weight.shape
    assert Cw == C

    if vmem_limit_bytes is None:
        vmem_limit_bytes = _default_vmem_limit_bytes()
    mxu_dtype = jnp.dtype(mxu_dtype)

    # ---- tile selection: pad the problem UP to the tile target (no divisor search) ----
    tb = _round_up(min(int(block_b), _round_up(B, 8)), 8)
    tn = _round_up(min(int(block_n), _round_up(N, 128)), 128)
    b_pad = _round_up(B, tb)
    n_pad = _round_up(N, tn)
    nb, nn = b_pad // tb, n_pad // tn

    # Tail tiles read past the logical array bounds (Pallas edge blocks); those rows hold
    # undefined data, but row i of x / row j of w only ever feeds output row i / column j,
    # and every padded output row/column is sliced off below -> valid results are exact.

    scale = jnp.asarray(scale_cls, jnp.float32).reshape((1,))
    has_bias = bias is not None

    # ---- decide what to hoist out of the (i, j) hot loop ----
    prep_x = nn >= 2                                               # x tile revisited
    prep_w = nb >= 2 and (normalize_w or jnp.dtype(weight.dtype) != mxu_dtype)
    # TODO(synk): optional cross-call caching of the pre-normalized weight and a v7x fp8
    # weight-storage path would further cut the weight stream; not implemented here.

    cparams_1d = pltpu.CompilerParams(dimension_semantics=("parallel",),
                                      vmem_limit_bytes=vmem_limit_bytes)

    if prep_x:
        x_feed = pl.pallas_call(
            functools.partial(_x_prep_kernel, normalize_x=normalize_x, out_dtype=mxu_dtype),
            grid=(nb,),
            in_specs=[pl.BlockSpec(memory_space=pltpu.SMEM),
                      pl.BlockSpec((tb, C), lambda i: (i, 0))],
            out_specs=pl.BlockSpec((tb, C), lambda i: (i, 0)),
            out_shape=jax.ShapeDtypeStruct((b_pad, C), mxu_dtype),
            compiler_params=cparams_1d,
        )(scale, x_in)
    else:
        x_feed = x_in

    if prep_w:
        w_feed = pl.pallas_call(
            functools.partial(_w_prep_kernel, normalize_w=normalize_w, out_dtype=mxu_dtype),
            grid=(nn,),
            in_specs=[pl.BlockSpec((tn, C), lambda j: (j, 0))],
            out_specs=pl.BlockSpec((tn, C), lambda j: (j, 0)),
            out_shape=jax.ShapeDtypeStruct((n_pad, C), mxu_dtype),
            compiler_params=cparams_1d,
        )(weight)
    else:
        w_feed = weight

    # ---- grid-order choice: keep the cheaper operand resident across the inner axis ----
    x_main_bytes = b_pad * C * (mxu_dtype.itemsize if prep_x else jnp.dtype(x_in.dtype).itemsize)
    w_main_bytes = n_pad * C * (mxu_dtype.itemsize if prep_w else jnp.dtype(weight.dtype).itemsize)
    x_resident = (x_main_bytes + nb * w_main_bytes) <= (w_main_bytes + nn * x_main_bytes)
    if x_resident:
        grid = (nb, nn)
        x_map = lambda i, j: (i, 0)
        w_map = lambda i, j: (j, 0)
        bias_map = lambda i, j: (0, j)
        out_map = lambda i, j: (i, j)
    else:
        grid = (nn, nb)
        x_map = lambda j, i: (i, 0)
        w_map = lambda j, i: (j, 0)
        bias_map = lambda j, i: (0, j)
        out_map = lambda j, i: (i, j)

    in_specs, args = [], []
    if not prep_x:
        in_specs.append(pl.BlockSpec(memory_space=pltpu.SMEM))    # scale (1,) scalar
        args.append(scale)
    in_specs.append(pl.BlockSpec((tb, C), x_map)); args.append(x_feed)
    # If profiling shows the streamed-operand DMA still exposed at large TB, add
    # pipeline_mode=pl.Buffered(3) on the streamed BlockSpec; default (2) kept here.
    in_specs.append(pl.BlockSpec((tn, C), w_map)); args.append(w_feed)
    if has_bias:
        b_arr = jnp.asarray(bias, jnp.float32).reshape((N,))
        if n_pad != N:
            b_arr = jnp.pad(b_arr, ((0, n_pad - N),))              # tiny (N floats)
        in_specs.append(pl.BlockSpec((1, tn), bias_map))
        args.append(b_arr.reshape(1, n_pad))

    kernel = functools.partial(
        _cosine_main_kernel,
        apply_x=not prep_x, normalize_x=normalize_x,
        apply_w=not prep_w, normalize_w=normalize_w,
        has_bias=has_bias, mxu_dtype=mxu_dtype)

    cost = pl.CostEstimate(
        flops=2 * b_pad * C * n_pad + 3 * b_pad * C + 3 * n_pad * C,
        transcendentals=(b_pad if normalize_x else 0) + (n_pad if normalize_w else 0),
        bytes_accessed=(x_main_bytes * (1 if x_resident else nn)
                        + w_main_bytes * (nb if x_resident else 1)
                        + 4 * b_pad * n_pad))

    out = pl.pallas_call(
        kernel,
        grid=grid,
        in_specs=in_specs,
        out_specs=pl.BlockSpec((tb, tn), out_map),
        out_shape=jax.ShapeDtypeStruct((b_pad, n_pad), jnp.float32),
        compiler_params=pltpu.CompilerParams(
            dimension_semantics=("parallel", "parallel"),
            vmem_limit_bytes=vmem_limit_bytes),
        cost_estimate=cost,
    )(*args)

    if b_pad != B or n_pad != N:
        out = out[:B, :N]
    return out


# ---------------------------------------------------------------------------
# Pure-JAX reference (matches the PyTorch forward)
# ---------------------------------------------------------------------------
def _reference(x, w, scale, bias=None, normalize_x=True, normalize_w=True):
    xn = x / jnp.maximum(jnp.linalg.norm(x, axis=1, keepdims=True), 1e-12) if normalize_x else x
    wn = w / jnp.maximum(jnp.linalg.norm(w, axis=1, keepdims=True), 1e-12) if normalize_w else w
    out = (xn @ wn.T) * scale
    if bias is not None:
        out = out + bias[None, :]
    return out


if __name__ == "__main__":
    scale_value = 20.0
    key = jax.random.PRNGKey(0)
    kx, kw, kb, kx2, kw2 = jax.random.split(key, 5)

    # Module-default small shapes: batch=8, num_channels=32, num_classes=16.
    B, C, N = 8, 32, 16
    x_in = jax.random.normal(kx, (B, C), dtype=jnp.float32)
    weight = jax.random.normal(kw, (N, C), dtype=jnp.float32) * np.sqrt(2.0 / C)
    scale_cls = jnp.full((1,), scale_value, dtype=jnp.float32)
    bias_vals = jax.random.normal(kb, (N,), dtype=jnp.float32)

    ref = _reference(x_in, weight, scale_value)

    # 1) f32 MXU feed, no bias (module default config), fully fused path: tight check.
    out1 = jax.block_until_ready(
        cosine_classifier_forward(x_in, weight, scale_cls, mxu_dtype=jnp.float32))
    np.testing.assert_allclose(np.asarray(out1), np.asarray(ref), rtol=1e-4, atol=5e-4)

    # 2) bf16 MXU feed (default) + fused bias: loose check (bf16 operands).
    out2 = jax.block_until_ready(
        cosine_classifier_forward(x_in, weight, scale_cls, bias=bias_vals))
    np.testing.assert_allclose(np.asarray(out2),
                               np.asarray(ref + bias_vals[None, :]),
                               rtol=2e-2, atol=1.5e-1)

    # 3) Multi-tile grid: both prep kernels, grid-order swap, N tail tile, bias, bf16.
    B3, C3, N3 = 24, 32, 300
    x3 = jax.random.normal(kx2, (B3, C3), dtype=jnp.float32)
    w3 = jax.random.normal(kw2, (N3, C3), dtype=jnp.float32) * np.sqrt(2.0 / C3)
    b3 = jax.random.normal(kb, (N3,), dtype=jnp.float32)
    ref3 = _reference(x3, w3, scale_value, bias=b3)
    out3 = jax.block_until_ready(
        cosine_classifier_forward(x3, w3, scale_cls, bias=b3, block_b=8, block_n=128))
    np.testing.assert_allclose(np.asarray(out3), np.asarray(ref3), rtol=2e-2, atol=1.5e-1)

    # 4) Ragged batch (B not a tile multiple) + fused-w (nb == 1) path, f32 feed: tight.
    B4 = 10
    x4 = jax.random.normal(kx2, (B4, C3), dtype=jnp.float32)
    ref4 = _reference(x4, w3, scale_value)
    out4 = jax.block_until_ready(
        cosine_classifier_forward(x4, w3, scale_cls, mxu_dtype=jnp.float32,
                                  block_b=512, block_n=128))
    np.testing.assert_allclose(np.asarray(out4), np.asarray(ref4), rtol=1e-4, atol=5e-4)

    print("KERNEL_OK")
</pallas_src>

<mosaic_0001>
module attributes {stable_mosaic.version = 11 : i64} {
  func.func @_cosine_main_kernel(%arg0: i32, %arg1: i32, %arg2: memref<1xf32, #tpu.memory_space<smem>>, %arg3: memref<8x32xf32, #tpu.memory_space<vmem>>, %arg4: memref<128x32xf32, #tpu.memory_space<vmem>>, %arg5: memref<8x128xf32, #tpu.memory_space<vmem>>) attributes {dimension_semantics = [#tpu.dimension_semantics<parallel>, #tpu.dimension_semantics<parallel>], iteration_bounds = array<i64: 1, 1>, scalar_prefetch = 0 : i64, scratch_operands = 0 : i64, tpu.core_type = #tpu.core_type<tc>, window_params = [{transform_indices = @transform_0, window_bounds = array<i64: 1>}, {transform_indices = @transform_1, window_bounds = array<i64: 8, 32>}, {transform_indices = @transform_2, window_bounds = array<i64: 128, 32>}, {transform_indices = @transform_3, window_bounds = array<i64: 8, 128>}]} {
    %c0 = arith.constant 0 : index
    %c0_0 = arith.constant 0 : index
    %0 = vector.load %arg3[%c0, %c0_0] : memref<8x32xf32, #tpu.memory_space<vmem>>, vector<8x32xf32>
    %c0_1 = arith.constant 0 : index
    %1 = memref.load %arg2[%c0_1] : memref<1xf32, #tpu.memory_space<smem>>
    %2 = arith.mulf %0, %0 : vector<8x32xf32>
    %cst = arith.constant dense<0.000000e+00> : vector<8xf32>
    %3 = vector.multi_reduction <add>, %2, %cst [1] : vector<8x32xf32> to vector<8xf32>
    %4 = vector.shape_cast %3 : vector<8xf32> to vector<8x1xf32>
    %cst_2 = arith.constant 1.000000e-24 : f32
    %5 = vector.broadcast %cst_2 : f32 to vector<8x1xf32>
    %6 = arith.maximumf %4, %5 : vector<8x1xf32>
    %7 = math.rsqrt %6 : vector<8x1xf32>
    %8 = vector.broadcast %1 : f32 to vector<8x1xf32>
    %9 = arith.mulf %8, %7 : vector<8x1xf32>
    %10 = vector.broadcast %9 : vector<8x1xf32> to vector<8x32xf32>
    %11 = arith.mulf %0, %10 : vector<8x32xf32>
    %c0_3 = arith.constant 0 : index
    %c0_4 = arith.constant 0 : index
    %12 = vector.load %arg4[%c0_3, %c0_4] : memref<128x32xf32, #tpu.memory_space<vmem>>, vector<128x32xf32>
    %13 = arith.mulf %12, %12 : vector<128x32xf32>
    %cst_5 = arith.constant dense<0.000000e+00> : vector<128xf32>
    %14 = vector.multi_reduction <add>, %13, %cst_5 [1] : vector<128x32xf32> to vector<128xf32>
    %15 = vector.shape_cast %14 : vector<128xf32> to vector<128x1xf32>
    %cst_6 = arith.constant 1.000000e-24 : f32
    %16 = vector.broadcast %cst_6 : f32 to vector<128x1xf32>
    %17 = arith.maximumf %15, %16 : vector<128x1xf32>
    %18 = math.rsqrt %17 : vector<128x1xf32>
    %19 = vector.broadcast %18 : vector<128x1xf32> to vector<128x32xf32>
    %20 = arith.mulf %12, %19 : vector<128x32xf32>
    %cst_7 = arith.constant dense<0.000000e+00> : vector<8x128xf32>
    %21 = tpu.matmul %11, %20, %cst_7 {dimension_numbers = #tpu.dot_dimension_numbers<[1], [1], [0], [0], [0, 0, 1, 0], [], []>} : vector<8x32xf32>, vector<128x32xf32>, vector<8x128xf32> -> vector<8x128xf32>
    %c0_8 = arith.constant 0 : index
    %c0_9 = arith.constant 0 : index
    %22 = vector.load %arg5[%c0_8, %c0_9] : memref<8x128xf32, #tpu.memory_space<vmem>>, vector<8x128xf32>
    tpu.vector_store %arg5[%c0_8, %c0_9], %21 {strides = array<i32>} : memref<8x128xf32, #tpu.memory_space<vmem>>, vector<8x128xf32>,
    return
  }
  func.func @transform_0(%arg0: i32, %arg1: i32) -> i32 {
    %c0_i32 = arith.constant 0 : i32
    %c0_i32_0 = arith.constant 0 : i32
    return %c0_i32 : i32
  }
  func.func @transform_1(%arg0: i32, %arg1: i32) -> (i32, i32) {
    %c0_i32 = arith.constant 0 : i32
    %c0_i32_0 = arith.constant 0 : i32
    return %arg0, %c0_i32 : i32, i32
  }
  func.func @transform_2(%arg0: i32, %arg1: i32) -> (i32, i32) {
    %c0_i32 = arith.constant 0 : i32
    %c0_i32_0 = arith.constant 0 : i32
    return %arg1, %c0_i32 : i32, i32
  }
  func.func @transform_3(%arg0: i32, %arg1: i32) -> (i32, i32) {
    %c0_i32 = arith.constant 0 : i32
    return %arg0, %arg1 : i32, i32
  }
}

</mosaic_0001>

<llo_original>
// kernel: tpu_custom_call.1
$region0: #{tpu_custom_call.1}
  #allocation0 [shape = 'u32[]', space=smem, size = 0x4, offset = 0x4, fixed_abs, tag = 'smem constant byte address 0x4 - core index']
  #allocation1 [shape = 'u32[144,128]{1,0:T(1,128)}', space=vmem, size = 0x12000, scoped, tag = 'internal scratch']
  #allocation2 [shape = 'f32[1]{0:T(128)S(6)}', space=smem, size = 0x200, scoped, tag = 'scoped memory for tpu_custom_call.1']
  %s0 = inlined_call_operand.<no memory space> [shape: f32[1], index: 0, kind: input, shape index: {}]
  %s1 = inlined_call_operand.hbm [shape: f32[8,32], index: 1, kind: input, shape index: {}]
  %s2 = inlined_call_operand.hbm [shape: f32[16,32], index: 2, kind: input, shape index: {}]
  %s3 = inlined_call_operand.hbm [shape: f32[8,128], index: 3, kind: output, shape index: {}]
  %s4 = sld [smem:[#allocation0]]
  $region30: #{tpu_custom_call.1} parent=0
    _
  %s6 = ssub.s32 1, %s4
  %s7 = scalar_select 0, %s6, %s4
  %8 = sst [smem:[#allocation2]] %s0
  $region1: #{tpu_custom_call.1} parent=0
    #allocation3 [shape = 'u8[4096]{0}', space=vmem, size = 0x1000, scoped, tag = 'input window, operand 1, single buffered']
    #allocation4 [shape = 's32[1]{0}', space=sflag, size = 0x4, scoped, tag = 'scoped memory for tpu_custom_call.1']
    #allocation5 [shape = 's32[1]{0}', space=sflag, size = 0x4, scoped, tag = 'scoped memory for tpu_custom_call.1']
    #allocation6 [shape = 'u8[65536]{0}', space=vmem, size = 0x10000, scoped, tag = 'input window, operand 2, single buffered']
    #allocation7 [shape = 's32[1]{0}', space=sflag, size = 0x4, scoped, tag = 'scoped memory for tpu_custom_call.1']
    #allocation8 [shape = 'u8[4096]{0}', space=vmem, size = 0x1000, scoped, tag = 'output window, operand 0, single buffered']
    %9 = vsyncpa [#allocation4], 0
    %10 = vsyncpa [#allocation7], 0
    %11 = vsyncpa [#allocation5], 0
    // Predicated region
    $region2: #{tpu_custom_call.1} parent=1 // pred_check
      _
    $region3: #{tpu_custom_call.1} parent=1 // pred_check_branch
      %13 = sbr.rel (0) target = $region5
    $region4: #{tpu_custom_call.1} parent=1 // pred_region
      _
    $region5: #{tpu_custom_call.1} parent=1 // pred_fallthru
      _
    // Predicated region
    $region6: #{tpu_custom_call.1} parent=1 // pred_check
      _
    $region7: #{tpu_custom_call.1} parent=1 // pred_check_branch
      %15 = sbr.rel (0) target = $region9
    $region8: #{tpu_custom_call.1} parent=1 // pred_region
      %s17 = ssub.s32 128, 128
      %18 = vsyncadd [#allocation4], %s17
      %s20 = sshll.u32 [#allocation3], 4
      %s21 = int_to_ptr.vmem [resolvable:$true] %s20
      %23 = dma.hbm_to_vmem [thread:$0]  %s1, 128, %s21, [#allocation4]
    $region9: #{tpu_custom_call.1} parent=1 // pred_fallthru
      _
    // Predicated region
    $region10: #{tpu_custom_call.1} parent=1 // pred_check
      _
    $region11: #{tpu_custom_call.1} parent=1 // pred_check_branch
      %25 = sbr.rel (0) target = $region13
    $region12: #{tpu_custom_call.1} parent=1 // pred_region
      %s27 = ssub.s32 2048, 256
      %28 = vsyncadd [#allocation7], %s27
      %s29 = sshll.u32 [#allocation6], 4
      %s30 = int_to_ptr.vmem [resolvable:$true] %s29
      %35 = dma.hbm_to_vmem [thread:$0]  %s2, 256, %s30, [#allocation7], 128, 128, 8
    $region13: #{tpu_custom_call.1} parent=1 // pred_fallthru
      _
    // Predicated region
    $region14: #{tpu_custom_call.1} parent=1 // pred_check
      _
    $region15: #{tpu_custom_call.1} parent=1 // pred_check_branch
      %37 = sbr.rel (0) target = $region17
    $region16: #{tpu_custom_call.1} parent=1 // pred_region
      %38 = dma.done [#allocation4], 128
    $region17: #{tpu_custom_call.1} parent=1 // pred_fallthru
      _
    // Predicated region
    $region18: #{tpu_custom_call.1} parent=1 // pred_check
      _
    $region19: #{tpu_custom_call.1} parent=1 // pred_check_branch
      %40 = sbr.rel (0) target = $region21
    $region20: #{tpu_custom_call.1} parent=1 // pred_region
      %41 = dma.done [#allocation7], 2048
    $region21: #{tpu_custom_call.1} parent=1 // pred_fallthru
      _
    %v42 = vld [vmem:[#allocation3] sm:$0xff]
    %s43 = sld [smem:[#allocation2]]
    %v44 = vmul.f32 %v42, %v42
    %vm45 = vcmask 261120
    %v46 = vsel %vm45, %v44, 0.0
    %47 = vadd.xlane.f32.xlu0 %v46
    %v48 = vpop.xlane.xlu0 %47
    %v49 = vmax.f32 %v48, 1e-24
    %v50 = vrsqrt.pop %v49
    %v51 = vstv %s43
    %v52 = vmul.f32 %v51, %v50
    %v53 = vmul.f32 %v42, %v52
    %v54 = vld [vmem:[#allocation6] sm:$0xff]
    %v55 = vld [vmem:[#allocation6 + $0x8] sm:$0xff]
    %v56 = vld [vmem:[#allocation6 + $0x10] sm:$0xff]
    %v57 = vld [vmem:[#allocation6 + $0x18] sm:$0xff]
    %v58 = vld [vmem:[#allocation6 + $0x20] sm:$0xff]
    %v59 = vld [vmem:[#allocation6 + $0x28] sm:$0xff]
    %v60 = vld [vmem:[#allocation6 + $0x30] sm:$0xff]
    %v61 = vld [vmem:[#allocation6 + $0x38] sm:$0xff]
    %v62 = vld [vmem:[#allocation6 + $0x40] sm:$0xff]
    %v63 = vld [vmem:[#allocation6 + $0x48] sm:$0xff]
    %v64 = vld [vmem:[#allocation6 + $0x50] sm:$0xff]
    %v65 = vld [vmem:[#allocation6 + $0x58] sm:$0xff]
    %v66 = vld [vmem:[#allocation6 + $0x60] sm:$0xff]
    %v67 = vld [vmem:[#allocation6 + $0x68] sm:$0xff]
    %v68 = vld [vmem:[#allocation6 + $0x70] sm:$0xff]
    %v69 = vld [vmem:[#allocation6 + $0x78] sm:$0xff]
    %v70 = vmul.f32 %v54, %v54
    %v71 = vmul.f32 %v55, %v55
    %v72 = vmul.f32 %v56, %v56
    %v73 = vmul.f32 %v57, %v57
    %v74 = vmul.f32 %v58, %v58
    %v75 = vmul.f32 %v59, %v59
    %v76 = vmul.f32 %v60, %v60
    %v77 = vmul.f32 %v61, %v61
    %v78 = vmul.f32 %v62, %v62
    %v79 = vmul.f32 %v63, %v63
    %v80 = vmul.f32 %v64, %v64
    %v81 = vmul.f32 %v65, %v65
    %v82 = vmul.f32 %v66, %v66
    %v83 = vmul.f32 %v67, %v67
    %v84 = vmul.f32 %v68, %v68
    %v85 = vmul.f32 %v69, %v69
    %v86 = vsel %vm45, %v70, 0.0
    %87 = vadd.xlane.f32.xlu0 %v86
    %v88 = vpop.xlane.xlu0 %87
    %v89 = vsel %vm45, %v71, 0.0
    %90 = vadd.xlane.f32.xlu0 %v89
    %v91 = vpop.xlane.xlu0 %90
    %v92 = vsel %vm45, %v72, 0.0
    %93 = vadd.xlane.f32.xlu0 %v92
    %v94 = vpop.xlane.xlu0 %93
    %v95 = vsel %vm45, %v73, 0.0
    %96 = vadd.xlane.f32.xlu0 %v95
    %v97 = vpop.xlane.xlu0 %96
    %v98 = vsel %vm45, %v74, 0.0
    %99 = vadd.xlane.f32.xlu0 %v98
    %v100 = vpop.xlane.xlu0 %99
    %v101 = vsel %vm45, %v75, 0.0
    %102 = vadd.xlane.f32.xlu0 %v101
    %v103 = vpop.xlane.xlu0 %102
    %v104 = vsel %vm45, %v76, 0.0
    %105 = vadd.xlane.f32.xlu0 %v104
    %v106 = vpop.xlane.xlu0 %105
    %v107 = vsel %vm45, %v77, 0.0
    %108 = vadd.xlane.f32.xlu0 %v107
    %v109 = vpop.xlane.xlu0 %108
    %v110 = vsel %vm45, %v78, 0.0
    %111 = vadd.xlane.f32.xlu0 %v110
    %v112 = vpop.xlane.xlu0 %111
    %v113 = vsel %vm45, %v79, 0.0
    %114 = vadd.xlane.f32.xlu0 %v113
    %v115 = vpop.xlane.xlu0 %114
    %v116 = vsel %vm45, %v80, 0.0
    %117 = vadd.xlane.f32.xlu0 %v116
    %v118 = vpop.xlane.xlu0 %117
    %v119 = vsel %vm45, %v81, 0.0
    %120 = vadd.xlane.f32.xlu0 %v119
    %v121 = vpop.xlane.xlu0 %120
    %v122 = vsel %vm45, %v82, 0.0
    %123 = vadd.xlane.f32.xlu0 %v122
    %v124 = vpop.xlane.xlu0 %123
    %v125 = vsel %vm45, %v83, 0.0
    %126 = vadd.xlane.f32.xlu0 %v125
    %v127 = vpop.xlane.xlu0 %126
    %v128 = vsel %vm45, %v84, 0.0
    %129 = vadd.xlane.f32.xlu0 %v128
    %v130 = vpop.xlane.xlu0 %129
    %v131 = vsel %vm45, %v85, 0.0
    %132 = vadd.xlane.f32.xlu0 %v131
    %v133 = vpop.xlane.xlu0 %132
    %v134 = vmax.f32 %v88, 1e-24
    %v135 = vmax.f32 %v91, 1e-24
    %v136 = vmax.f32 %v94, 1e-24
    %v137 = vmax.f32 %v97, 1e-24
    %v138 = vmax.f32 %v100, 1e-24
    %v139 = vmax.f32 %v103, 1e-24
    %v140 = vmax.f32 %v106, 1e-24
    %v141 = vmax.f32 %v109, 1e-24
    %v142 = vmax.f32 %v112, 1e-24
    %v143 = vmax.f32 %v115, 1e-24
    %v144 = vmax.f32 %v118, 1e-24
    %v145 = vmax.f32 %v121, 1e-24
    %v146 = vmax.f32 %v124, 1e-24
    %v147 = vmax.f32 %v127, 1e-24
    %v148 = vmax.f32 %v130, 1e-24
    %v149 = vmax.f32 %v133, 1e-24
    %v150 = vrsqrt.pop %v134
    %v151 = vrsqrt.pop %v135
    %v152 = vrsqrt.pop %v136
    %v153 = vrsqrt.pop %v137
    %v154 = vrsqrt.pop %v138
    %v155 = vrsqrt.pop %v139
    %v156 = vrsqrt.pop %v140
    %v157 = vrsqrt.pop %v141
    %v158 = vrsqrt.pop %v142
    %v159 = vrsqrt.pop %v143
    %v160 = vrsqrt.pop %v144
    %v161 = vrsqrt.pop %v145
    %v162 = vrsqrt.pop %v146
    %v163 = vrsqrt.pop %v147
    %v164 = vrsqrt.pop %v148
    %v165 = vrsqrt.pop %v149
    %v166 = vmul.f32 %v54, %v150
    %v167 = vmul.f32 %v55, %v151
    %v168 = vmul.f32 %v56, %v152
    %v169 = vmul.f32 %v57, %v153
    %v170 = vmul.f32 %v58, %v154
    %v171 = vmul.f32 %v59, %v155
    %v172 = vmul.f32 %v60, %v156
    %v173 = vmul.f32 %v61, %v157
    %v174 = vmul.f32 %v62, %v158
    %v175 = vmul.f32 %v63, %v159
    %v176 = vmul.f32 %v64, %v160
    %v177 = vmul.f32 %v65, %v161
    %v178 = vmul.f32 %v66, %v162
    %v179 = vmul.f32 %v67, %v163
    %v180 = vmul.f32 %v68, %v164
    %v181 = vmul.f32 %v69, %v165
    %v183 = vsel %vm45, %v53, 0
    %v186 = vsel %vm45, %v166, 0
    %v189 = vsel %vm45, %v167, 0
    %v192 = vsel %vm45, %v168, 0
    %v195 = vsel %vm45, %v169, 0
    %v198 = vsel %vm45, %v170, 0
    %v201 = vsel %vm45, %v171, 0
    %v204 = vsel %vm45, %v172, 0
    %v207 = vsel %vm45, %v173, 0
    %v210 = vsel %vm45, %v174, 0
    %v213 = vsel %vm45, %v175, 0
    %v216 = vsel %vm45, %v176, 0
    %v219 = vsel %vm45, %v177, 0
    %v222 = vsel %vm45, %v178, 0
    %v225 = vsel %vm45, %v179, 0
    %v228 = vsel %vm45, %v180, 0
    %v231 = vsel %vm45, %v181, 0
    %233 = vmatprep.subr.mxu0 0.0
    %234 = vmatpush1.xpose.msra.mxu0 %v186
    %235 = vmatprep.subr.mxu0 0.0
    %236 = vmatpush1.xpose.msra.mxu0 %v189
    %237 = vmatprep.subr.mxu0 0.0
    %238 = vmatpush1.xpose.msra.mxu0 %v192
    %239 = vmatprep.subr.mxu0 0.0
    %240 = vmatpush1.xpose.msra.mxu0 %v195
    %241 = vmatprep.subr.mxu0 0.0
    %242 = vmatpush1.xpose.msra.mxu0 %v198
    %243 = vmatprep.subr.mxu0 0.0
    %244 = vmatpush1.xpose.msra.mxu0 %v201
    %245 = vmatprep.subr.mxu0 0.0
    %246 = vmatpush1.xpose.msra.mxu0 %v204
    %247 = vmatprep.subr.mxu0 0.0
    %248 = vmatpush1.xpose.msra.mxu0 %v207
    %249 = vmatprep.subr.mxu0 0.0
    %250 = vmatpush1.xpose.msra.mxu0 %v210
    %251 = vmatprep.subr.mxu0 0.0
    %252 = vmatpush1.xpose.msra.mxu0 %v213
    %253 = vmatprep.subr.mxu0 0.0
    %254 = vmatpush1.xpose.msra.mxu0 %v216
    %255 = vmatprep.subr.mxu0 0.0
    %256 = vmatpush1.xpose.msra.mxu0 %v219
    %257 = vmatprep.subr.mxu0 0.0
    %258 = vmatpush1.xpose.msra.mxu0 %v222
    %259 = vmatprep.subr.mxu0 0.0
    %260 = vmatpush1.xpose.msra.mxu0 %v225
    %261 = vmatprep.subr.mxu0 0.0
    %262 = vmatpush1.xpose.msra.mxu0 %v228
    %263 = vmatprep.subr.mxu0 0.0
    %264 = vmatpush1.xpose.msra.mxu0 %v231
    %265 = vmatprep.subr.mxu0 0.0
    %266 = vmatpush1.xpose.msra.mxu0 0.0
    %267 = vmatprep.subr.mxu0 0.0
    %268 = vmatpush1.xpose.msra.mxu0 0.0
    %269 = vmatprep.subr.mxu0 0.0
    %270 = vmatpush1.xpose.msra.mxu0 0.0
    %271 = vmatprep.subr.mxu0 0.0
    %272 = vmatpush1.xpose.msra.mxu0 0.0
    %273 = vmatprep.subr.mxu0 0.0
    %274 = vmatpush1.xpose.msra.mxu0 0.0
    %275 = vmatprep.subr.mxu0 0.0
    %276 = vmatpush1.xpose.msra.mxu0 0.0
    %277 = vmatprep.subr.mxu0 0.0
    %278 = vmatpush1.xpose.msra.mxu0 0.0
    %279 = vmatprep.subr.mxu0 0.0
    %280 = vmatpush1.xpose.msra.mxu0 0.0
    %281 = vmatprep.subr.mxu0 0.0
    %282 = vmatpush1.xpose.msra.mxu0 0.0
    %283 = vmatprep.subr.mxu0 0.0
    %284 = vmatpush1.xpose.msra.mxu0 0.0
    %285 = vmatprep.subr.mxu0 0.0
    %286 = vmatpush1.xpose.msra.mxu0 0.0
    %287 = vmatprep.subr.mxu0 0.0
    %288 = vmatpush1.xpose.msra.mxu0 0.0
    %289 = vmatprep.subr.mxu0 0.0
    %290 = vmatpush1.xpose.msra.mxu0 0.0
    %291 = vmatprep.subr.mxu0 0.0
    %292 = vmatpush1.xpose.msra.mxu0 0.0
    %293 = vmatprep.subr.mxu0 0.0
    %294 = vmatpush1.xpose.msra.mxu0 0.0
    %295 = vmatprep.subr.mxu0 0.0
    %296 = vmatpush1.xpose.msra.mxu0 0.0
    %297 = vmatprep.mubr.f32.mxu0 0.0
    %298 = vmatmul.mubr.f32.gmra.mrb[0].mxu0 %v183
    %v299 = vpop.f32.mrb[0].mxu0
    %v300 = vadd.f32 0.0, %v299
    %v301 = vpop.f32.mrb[0].mxu0
    %302 = vdwg.mxu0
    %303 = vst [vmem:[#allocation8] sm:$0xff] %v300
    // Predicated region
    $region22: #{tpu_custom_call.1} parent=1 // pred_check
      _
    $region23: #{tpu_custom_call.1} parent=1 // pred_check_branch
      %305 = sbr.rel (0) target = $region25
    $region24: #{tpu_custom_call.1} parent=1 // pred_region
      %s307 = ssub.s32 128, 128
      %308 = vsyncadd [#allocation5], %s307
      %s310 = sshll.u32 [#allocation8], 4
      %s311 = int_to_ptr.vmem [resolvable:$true] %s310
      %313 = dma.vmem_to_hbm [thread:$0]  %s311, 128, %s3, [#allocation5]
    $region25: #{tpu_custom_call.1} parent=1 // pred_fallthru
      _
    // Predicated region
    $region26: #{tpu_custom_call.1} parent=1 // pred_check
      _
    $region27: #{tpu_custom_call.1} parent=1 // pred_check_branch
      %315 = sbr.rel (0) target = $region29
    $region28: #{tpu_custom_call.1} parent=1 // pred_region
      %316 = dma.done [#allocation5], 128
    $region29: #{tpu_custom_call.1} parent=1 // pred_fallthru
      _
    %317 = vsyncpa [#allocation4], 1
    %318 = vsyncpa [#allocation7], 1
    %319 = vsyncpa [#allocation5], 1

</llo_original>
